<compile_context>
chip_gen: v5e
topology: v5e:2x2
jax: 0.10.0
libtpu: 0.0.40
codegen_flags: <defaults>
</compile_context>

<pallas_src>
from math import sqrt

import numpy as np
import jax
import jax.numpy as jnp
from jax.experimental import pallas as pl
from jax.experimental.pallas import tpu as pltpu

# ----------------------- model configuration (parametersConfig) ---------------
PATCH = 7                      # patchSize (PyTorch default)
KSIZE = 5                      # kernelSizes = [5] (default)
PK = 2                         # poolingKernelSize (MaxPool2d(PK, stride=1))
PKPK = PK * PK
OUT_CH = [8, 32, 16, 8]        # outChannelsSizes (conv channels, 3 dense widths)
SKIP = 6                       # LinearInputSkipSize
BATCH = 2

HO = PATCH - KSIZE + 1         # conv output spatial size (valid conv)      = 3
HP = HO - PK + 1               # maxpool (kernel PK, stride 1) output size  = 2
WP = HP
S = HP * WP                    # pooled spatial positions                   = 4
KK = KSIZE * KSIZE             # conv taps                                  = 25
C0, D1, D2, D3 = OUT_CH
FEAT = C0 * S                  # flattened conv-block features              = 32
FIN = S * KK                   # per-pool-offset im2col feature width       = 100

TB = 8                         # batch rows per grid step (full sublane tile)
OUT_PAD = 128                  # lane-padded final output width


# ----------------------------- fused Pallas kernel -----------------------------
def _fused_forward_kernel(x_ref, ctx_ref,
                          wexp_ref, bexp_ref, aexp_ref,
                          w3i_ref, w3c_ref, a3_ref,
                          w4_ref, b4_ref, a4_ref,
                          w5_ref, b5_ref, a5_ref,
                          wo_ref, bo_ref, o_ref):
    """Whole forward pass for one TB-row batch tile, fully resident on-chip."""
    wexp = wexp_ref[...]
    bexp = bexp_ref[...]
    aexp = aexp_ref[...]

    # Conv2d(1->C0, k) + bias + per-channel PReLU + MaxPool2d(PK, stride=1),
    # fused: one matmul per pool-window offset, max-reduce over the offsets.
    pooled = None
    for widx in range(PKPK):                      # static 4-iteration loop
        z = jnp.dot(x_ref[widx], wexp, preferred_element_type=jnp.float32) + bexp
        z = jnp.where(z >= 0.0, z, aexp * z)      # per-channel PReLU
        pooled = z if pooled is None else jnp.maximum(pooled, z)
    # pooled: (TB, C0*HP*WP) already in PyTorch NCHW-flatten feature order.

    # DenseL3 (bias=False) on [flatten | context]; concat folded into split weights.
    h = (jnp.dot(pooled, w3i_ref[...], preferred_element_type=jnp.float32)
         + jnp.dot(ctx_ref[...], w3c_ref[...], preferred_element_type=jnp.float32))
    h = jnp.where(h >= 0.0, h, a3_ref[...] * h)   # PReLU (scalar, broadcast)

    # DenseL4 + PReLU
    h = jnp.dot(h, w4_ref[...], preferred_element_type=jnp.float32) + b4_ref[...]
    h = jnp.where(h >= 0.0, h, a4_ref[...] * h)

    # DenseL5 + PReLU
    h = jnp.dot(h, w5_ref[...], preferred_element_type=jnp.float32) + b5_ref[...]
    h = jnp.where(h >= 0.0, h, a5_ref[...] * h)

    # DenseOutput (lane-padded to 128 for an unmasked store)
    o_ref[...] = jnp.dot(h, wo_ref[...], preferred_element_type=jnp.float32) + bo_ref[...]


# ------------------------------- wrapper / glue ---------------------------------
def _build_gather_index():
    """idx[(dy,dx), (hp,wp,ky,kx)] -> flat pixel index into inputSample[:, :P*P].

    PyTorch's transposed reshape gives img[b, r, c] = flat[b, c*P + r]; the conv
    input pixel for pooled position (hp, wp), pool offset (dy, dx), tap (ky, kx)
    is img[b, hp+dy+ky, wp+dx+kx].
    """
    idx = np.zeros((PKPK, FIN), dtype=np.int32)
    w_i = 0
    for dy in range(PK):
        for dx in range(PK):
            f = 0
            for hp in range(HP):
                for wp in range(WP):
                    for ky in range(KSIZE):
                        for kx in range(KSIZE):
                            r = hp + dy + ky
                            c = wp + dx + kx
                            idx[w_i, f] = c * PATCH + r
                            f += 1
            w_i += 1
    return idx


def kaiming_uniform(key, shape, fan_in):
    # kaiming_uniform_(nonlinearity='leaky_relu', a=0): bound = sqrt(6 / fan_in)
    bound = sqrt(6.0 / fan_in)
    return jax.random.uniform(key, shape, jnp.float32, -bound, bound)


def init_params(key):
    """Torch-equivalent parameter set (eval mode, useBatchNorm=False)."""
    ks = jax.random.split(key, 6)
    conv_w = kaiming_uniform(ks[0], (C0, 1, KSIZE, KSIZE), 1 * KSIZE * KSIZE)
    conv_b = jnp.zeros((C0,), jnp.float32)
    prelu1 = jnp.full((C0,), 0.25, jnp.float32)     # nn.PReLU(C0) default

    lin_in = FEAT + SKIP
    w3 = kaiming_uniform(ks[1], (D1, lin_in), lin_in)          # DenseL3, bias=False
    w4 = kaiming_uniform(ks[2], (D2, D1), D1)
    b4 = jnp.zeros((D2,), jnp.float32)
    w5 = kaiming_uniform(ks[3], (D3, D2), D2)
    b5 = jnp.zeros((D3,), jnp.float32)

    # DenseOutput keeps PyTorch's default Linear init (not re-initialized).
    bnd = 1.0 / sqrt(D3)
    wout = jax.random.uniform(ks[4], (2, D3), jnp.float32, -bnd, bnd)
    bout = jax.random.uniform(ks[5], (2,), jnp.float32, -bnd, bnd)

    return dict(conv_w=conv_w, conv_b=conv_b, prelu1=prelu1,
                w3=w3, a3=jnp.float32(0.25),
                w4=w4, b4=b4, a4=jnp.float32(0.25),
                w5=w5, b5=b5, a5=jnp.float32(0.25),
                wout=wout, bout=bout)


def prepare_kernel_params(params):
    """One-time weight preparation (layout plumbing only, no per-call cost)."""
    # Expanded block-diagonal conv weights: rows = (hp,wp,ky,kx), cols = (c,hp,wp).
    wk = params["conv_w"].reshape(C0, KK).T                    # (KK, C0)
    eye = jnp.eye(S, dtype=jnp.float32)
    wexp = jnp.einsum("kc,st->skct", wk, eye).reshape(FIN, FEAT)
    bexp = jnp.repeat(params["conv_b"], S)[None, :]            # (1, C0*S)
    aexp = jnp.repeat(params["prelu1"], S)[None, :]            # (1, C0*S)

    # DenseL3 split into (flattened-conv, context) halves -> no in-kernel concat.
    w3i = params["w3"][:, :FEAT].T                             # (FEAT, D1)
    w3c = params["w3"][:, FEAT:].T                             # (SKIP, D1)

    wo = jnp.zeros((D3, OUT_PAD), jnp.float32).at[:, :2].set(params["wout"].T)
    bo = jnp.zeros((1, OUT_PAD), jnp.float32).at[0, :2].set(params["bout"])

    return dict(
        wexp=wexp, bexp=bexp, aexp=aexp,
        w3i=w3i, w3c=w3c, a3=jnp.full((1, D1), params["a3"], jnp.float32),
        w4=params["w4"].T, b4=params["b4"][None, :],
        a4=jnp.full((1, D2), params["a4"], jnp.float32),
        w5=params["w5"].T, b5=params["b5"][None, :],
        a5=jnp.full((1, D3), params["a5"], jnp.float32),
        wo=wo, bo=bo,
        idx=jnp.asarray(_build_gather_index().reshape(-1)),
    )


def forward_pallas(kp, x):
    B = x.shape[0]
    img_flat = x[:, :PATCH * PATCH]
    ctx = x[:, PATCH * PATCH:]

    # Input layout plumbing: one gather builds the im2col columns for every
    # pool-window offset directly from the flat patch (handles the transposed
    # img2Dinput reshape too).
    gath = jnp.take(img_flat, kp["idx"], axis=1)               # (B, PKPK*FIN)
    X = gath.reshape(B, PKPK, FIN).transpose(1, 0, 2)          # (PKPK, B, FIN)

    Bp = ((B + TB - 1) // TB) * TB
    if Bp != B:
        X = jnp.pad(X, ((0, 0), (0, Bp - B), (0, 0)))
        ctx = jnp.pad(ctx, ((0, Bp - B), (0, 0)))
    nb = Bp // TB

    full = lambda i: (0, 0)
    out = pl.pallas_call(
        _fused_forward_kernel,
        out_shape=jax.ShapeDtypeStruct((Bp, OUT_PAD), jnp.float32),
        grid_spec=pltpu.PrefetchScalarGridSpec(
            num_scalar_prefetch=0,
            grid=(nb,),
            in_specs=[
                pl.BlockSpec((PKPK, TB, FIN), lambda i: (0, i, 0)),  # X
                pl.BlockSpec((TB, SKIP), lambda i: (i, 0)),          # context
                pl.BlockSpec((FIN, FEAT), full),                     # wexp
                pl.BlockSpec((1, FEAT), full),                       # bexp
                pl.BlockSpec((1, FEAT), full),                       # aexp
                pl.BlockSpec((FEAT, D1), full),                      # w3 (img part)
                pl.BlockSpec((SKIP, D1), full),                      # w3 (ctx part)
                pl.BlockSpec((1, D1), full),                         # prelu3
                pl.BlockSpec((D1, D2), full),                        # w4
                pl.BlockSpec((1, D2), full),                         # b4
                pl.BlockSpec((1, D2), full),                         # prelu4
                pl.BlockSpec((D2, D3), full),                        # w5
                pl.BlockSpec((1, D3), full),                         # b5
                pl.BlockSpec((1, D3), full),                         # prelu5
                pl.BlockSpec((D3, OUT_PAD), full),                   # w_out (padded)
                pl.BlockSpec((1, OUT_PAD), full),                    # b_out (padded)
            ],
            out_specs=pl.BlockSpec((TB, OUT_PAD), lambda i: (i, 0)),
        ),
        compiler_params=pltpu.CompilerParams(
            dimension_semantics=("parallel",)),
    )(X, ctx, kp["wexp"], kp["bexp"], kp["aexp"],
      kp["w3i"], kp["w3c"], kp["a3"],
      kp["w4"], kp["b4"], kp["a4"],
      kp["w5"], kp["b5"], kp["a5"],
      kp["wo"], kp["bo"])
    return out[:B, :2]


# ------------------------- pure-JAX reference (torch semantics) -----------------
def _dotp(a, b):
    return jnp.dot(a, b, precision=jax.lax.Precision.HIGHEST)


def forward_ref(params, x):
    B = x.shape[0]
    img_flat = x[:, :PATCH * PATCH]
    ctx = x[:, PATCH * PATCH:]
    # img2Dinput[b, 0, r, c] = inputSample[b, c*P + r]
    img = jnp.transpose(img_flat.reshape(B, PATCH, PATCH), (0, 2, 1))

    conv = jnp.zeros((B, C0, HO, HO), jnp.float32)
    for ky in range(KSIZE):
        for kx in range(KSIZE):
            wv = params["conv_w"][:, 0, ky, kx]                 # (C0,)
            conv = conv + img[:, None, ky:ky + HO, kx:kx + HO] * wv[None, :, None, None]
    conv = conv + params["conv_b"][None, :, None, None]
    a1 = params["prelu1"][None, :, None, None]
    conv = jnp.where(conv >= 0.0, conv, a1 * conv)

    pooled = None                                               # MaxPool2d(PK, stride=1)
    for dy in range(PK):
        for dx in range(PK):
            win = conv[:, :, dy:dy + HP, dx:dx + WP]
            pooled = win if pooled is None else jnp.maximum(pooled, win)

    val = jnp.concatenate([pooled.reshape(B, -1), ctx], axis=1)
    val = _dotp(val, params["w3"].T)                            # DenseL3 (no bias)
    val = jnp.where(val >= 0.0, val, params["a3"] * val)
    val = _dotp(val, params["w4"].T) + params["b4"]
    val = jnp.where(val >= 0.0, val, params["a4"] * val)
    val = _dotp(val, params["w5"].T) + params["b5"]
    val = jnp.where(val >= 0.0, val, params["a5"] * val)
    return _dotp(val, params["wout"].T) + params["bout"]


# ------------------------------------ main --------------------------------------
if __name__ == "__main__":
    key = jax.random.PRNGKey(0)
    pkey, xkey = jax.random.split(key)
    params = init_params(pkey)
    kp = prepare_kernel_params(params)

    x = jax.random.normal(xkey, (BATCH, PATCH * PATCH + SKIP), jnp.float32)

    fwd = jax.jit(forward_pallas)
    out = jax.block_until_ready(fwd(kp, x))
    ref = jax.block_until_ready(forward_ref(params, x))

    assert out.shape == (BATCH, 2), out.shape
    assert np.allclose(np.asarray(out), np.asarray(ref), rtol=1e-3, atol=1e-3), (
        np.asarray(out), np.asarray(ref))
    print("KERNEL_OK")
</pallas_src>

<mosaic_0001>
module attributes {stable_mosaic.version = 11 : i64} {
  func.func @_fused_forward_kernel(%arg0: i32, %arg1: memref<4x8x100xf32, #tpu.memory_space<vmem>>, %arg2: memref<8x6xf32, #tpu.memory_space<vmem>>, %arg3: memref<100x32xf32, #tpu.memory_space<vmem>>, %arg4: memref<1x32xf32, #tpu.memory_space<vmem>>, %arg5: memref<1x32xf32, #tpu.memory_space<vmem>>, %arg6: memref<32x32xf32, #tpu.memory_space<vmem>>, %arg7: memref<6x32xf32, #tpu.memory_space<vmem>>, %arg8: memref<1x32xf32, #tpu.memory_space<vmem>>, %arg9: memref<32x16xf32, #tpu.memory_space<vmem>>, %arg10: memref<1x16xf32, #tpu.memory_space<vmem>>, %arg11: memref<1x16xf32, #tpu.memory_space<vmem>>, %arg12: memref<16x8xf32, #tpu.memory_space<vmem>>, %arg13: memref<1x8xf32, #tpu.memory_space<vmem>>, %arg14: memref<1x8xf32, #tpu.memory_space<vmem>>, %arg15: memref<8x128xf32, #tpu.memory_space<vmem>>, %arg16: memref<1x128xf32, #tpu.memory_space<vmem>>, %arg17: memref<8x128xf32, #tpu.memory_space<vmem>>) attributes {dimension_semantics = [#tpu.dimension_semantics<parallel>], iteration_bounds = array<i64: 1>, scalar_prefetch = 0 : i64, scratch_operands = 0 : i64, tpu.core_type = #tpu.core_type<tc>, window_params = [{transform_indices = @transform_0, window_bounds = array<i64: 4, 8, 100>}, {transform_indices = @transform_1, window_bounds = array<i64: 8, 6>}, {pipeline_mode = #tpu.pipeline_mode<synchronous>, transform_indices = @transform_2, window_bounds = array<i64: 100, 32>}, {pipeline_mode = #tpu.pipeline_mode<synchronous>, transform_indices = @transform_3, window_bounds = array<i64: 1, 32>}, {pipeline_mode = #tpu.pipeline_mode<synchronous>, transform_indices = @transform_4, window_bounds = array<i64: 1, 32>}, {pipeline_mode = #tpu.pipeline_mode<synchronous>, transform_indices = @transform_5, window_bounds = array<i64: 32, 32>}, {pipeline_mode = #tpu.pipeline_mode<synchronous>, transform_indices = @transform_6, window_bounds = array<i64: 6, 32>}, {pipeline_mode = #tpu.pipeline_mode<synchronous>, transform_indices = @transform_7, window_bounds = array<i64: 1, 32>}, {pipeline_mode = #tpu.pipeline_mode<synchronous>, transform_indices = @transform_8, window_bounds = array<i64: 32, 16>}, {pipeline_mode = #tpu.pipeline_mode<synchronous>, transform_indices = @transform_9, window_bounds = array<i64: 1, 16>}, {pipeline_mode = #tpu.pipeline_mode<synchronous>, transform_indices = @transform_10, window_bounds = array<i64: 1, 16>}, {pipeline_mode = #tpu.pipeline_mode<synchronous>, transform_indices = @transform_11, window_bounds = array<i64: 16, 8>}, {pipeline_mode = #tpu.pipeline_mode<synchronous>, transform_indices = @transform_12, window_bounds = array<i64: 1, 8>}, {pipeline_mode = #tpu.pipeline_mode<synchronous>, transform_indices = @transform_13, window_bounds = array<i64: 1, 8>}, {pipeline_mode = #tpu.pipeline_mode<synchronous>, transform_indices = @transform_14, window_bounds = array<i64: 8, 128>}, {pipeline_mode = #tpu.pipeline_mode<synchronous>, transform_indices = @transform_15, window_bounds = array<i64: 1, 128>}, {transform_indices = @transform_16, window_bounds = array<i64: 8, 128>}]} {
    %c0 = arith.constant 0 : index
    %c0_0 = arith.constant 0 : index
    %0 = vector.load %arg3[%c0, %c0_0] : memref<100x32xf32, #tpu.memory_space<vmem>>, vector<100x32xf32>
    %c0_1 = arith.constant 0 : index
    %c0_2 = arith.constant 0 : index
    %1 = vector.load %arg4[%c0_1, %c0_2] : memref<1x32xf32, #tpu.memory_space<vmem>>, vector<1x32xf32>
    %c0_3 = arith.constant 0 : index
    %c0_4 = arith.constant 0 : index
    %2 = vector.load %arg5[%c0_3, %c0_4] : memref<1x32xf32, #tpu.memory_space<vmem>>, vector<1x32xf32>
    %c0_5 = arith.constant 0 : index
    %c0_6 = arith.constant 0 : index
    %c0_7 = arith.constant 0 : index
    %3 = vector.load %arg1[%c0_5, %c0_6, %c0_7] : memref<4x8x100xf32, #tpu.memory_space<vmem>>, vector<1x8x100xf32>
    %4 = vector.shape_cast %3 : vector<1x8x100xf32> to vector<8x100xf32>
    %cst = arith.constant dense<0.000000e+00> : vector<8x32xf32>
    %5 = tpu.matmul %4, %0, %cst {dimension_numbers = #tpu.dot_dimension_numbers<[1], [0], [0], [1], [0, 0, 1, 1], [], []>} : vector<8x100xf32>, vector<100x32xf32>, vector<8x32xf32> -> vector<8x32xf32>
    %6 = vector.broadcast %1 : vector<1x32xf32> to vector<8x32xf32>
    %7 = arith.addf %5, %6 : vector<8x32xf32>
    %cst_8 = arith.constant 0.000000e+00 : f32
    %8 = vector.broadcast %cst_8 : f32 to vector<8x32xf32>
    %9 = arith.cmpf oge, %7, %8 : vector<8x32xf32>
    %10 = vector.broadcast %2 : vector<1x32xf32> to vector<8x32xf32>
    %11 = arith.mulf %10, %7 : vector<8x32xf32>
    %12 = arith.select %9, %7, %11 : vector<8x32xi1>, vector<8x32xf32>
    %c1 = arith.constant 1 : index
    %c0_9 = arith.constant 0 : index
    %c0_10 = arith.constant 0 : index
    %13 = vector.load %arg1[%c1, %c0_9, %c0_10] : memref<4x8x100xf32, #tpu.memory_space<vmem>>, vector<1x8x100xf32>
    %14 = vector.shape_cast %13 : vector<1x8x100xf32> to vector<8x100xf32>
    %cst_11 = arith.constant dense<0.000000e+00> : vector<8x32xf32>
    %15 = tpu.matmul %14, %0, %cst_11 {dimension_numbers = #tpu.dot_dimension_numbers<[1], [0], [0], [1], [0, 0, 1, 1], [], []>} : vector<8x100xf32>, vector<100x32xf32>, vector<8x32xf32> -> vector<8x32xf32>
    %16 = vector.broadcast %1 : vector<1x32xf32> to vector<8x32xf32>
    %17 = arith.addf %15, %16 : vector<8x32xf32>
    %cst_12 = arith.constant 0.000000e+00 : f32
    %18 = vector.broadcast %cst_12 : f32 to vector<8x32xf32>
    %19 = arith.cmpf oge, %17, %18 : vector<8x32xf32>
    %20 = vector.broadcast %2 : vector<1x32xf32> to vector<8x32xf32>
    %21 = arith.mulf %20, %17 : vector<8x32xf32>
    %22 = arith.select %19, %17, %21 : vector<8x32xi1>, vector<8x32xf32>
    %23 = arith.maximumf %12, %22 : vector<8x32xf32>
    %c2 = arith.constant 2 : index
    %c0_13 = arith.constant 0 : index
    %c0_14 = arith.constant 0 : index
    %24 = vector.load %arg1[%c2, %c0_13, %c0_14] : memref<4x8x100xf32, #tpu.memory_space<vmem>>, vector<1x8x100xf32>
    %25 = vector.shape_cast %24 : vector<1x8x100xf32> to vector<8x100xf32>
    %cst_15 = arith.constant dense<0.000000e+00> : vector<8x32xf32>
    %26 = tpu.matmul %25, %0, %cst_15 {dimension_numbers = #tpu.dot_dimension_numbers<[1], [0], [0], [1], [0, 0, 1, 1], [], []>} : vector<8x100xf32>, vector<100x32xf32>, vector<8x32xf32> -> vector<8x32xf32>
    %27 = vector.broadcast %1 : vector<1x32xf32> to vector<8x32xf32>
    %28 = arith.addf %26, %27 : vector<8x32xf32>
    %cst_16 = arith.constant 0.000000e+00 : f32
    %29 = vector.broadcast %cst_16 : f32 to vector<8x32xf32>
    %30 = arith.cmpf oge, %28, %29 : vector<8x32xf32>
    %31 = vector.broadcast %2 : vector<1x32xf32> to vector<8x32xf32>
    %32 = arith.mulf %31, %28 : vector<8x32xf32>
    %33 = arith.select %30, %28, %32 : vector<8x32xi1>, vector<8x32xf32>
    %34 = arith.maximumf %23, %33 : vector<8x32xf32>
    %c3 = arith.constant 3 : index
    %c0_17 = arith.constant 0 : index
    %c0_18 = arith.constant 0 : index
    %35 = vector.load %arg1[%c3, %c0_17, %c0_18] : memref<4x8x100xf32, #tpu.memory_space<vmem>>, vector<1x8x100xf32>
    %36 = vector.shape_cast %35 : vector<1x8x100xf32> to vector<8x100xf32>
    %cst_19 = arith.constant dense<0.000000e+00> : vector<8x32xf32>
    %37 = tpu.matmul %36, %0, %cst_19 {dimension_numbers = #tpu.dot_dimension_numbers<[1], [0], [0], [1], [0, 0, 1, 1], [], []>} : vector<8x100xf32>, vector<100x32xf32>, vector<8x32xf32> -> vector<8x32xf32>
    %38 = vector.broadcast %1 : vector<1x32xf32> to vector<8x32xf32>
    %39 = arith.addf %37, %38 : vector<8x32xf32>
    %cst_20 = arith.constant 0.000000e+00 : f32
    %40 = vector.broadcast %cst_20 : f32 to vector<8x32xf32>
    %41 = arith.cmpf oge, %39, %40 : vector<8x32xf32>
    %42 = vector.broadcast %2 : vector<1x32xf32> to vector<8x32xf32>
    %43 = arith.mulf %42, %39 : vector<8x32xf32>
    %44 = arith.select %41, %39, %43 : vector<8x32xi1>, vector<8x32xf32>
    %45 = arith.maximumf %34, %44 : vector<8x32xf32>
    %c0_21 = arith.constant 0 : index
    %c0_22 = arith.constant 0 : index
    %46 = vector.load %arg6[%c0_21, %c0_22] : memref<32x32xf32, #tpu.memory_space<vmem>>, vector<32x32xf32>
    %cst_23 = arith.constant dense<0.000000e+00> : vector<8x32xf32>
    %47 = tpu.matmul %45, %46, %cst_23 {dimension_numbers = #tpu.dot_dimension_numbers<[1], [0], [0], [1], [0, 0, 1, 1], [], []>} : vector<8x32xf32>, vector<32x32xf32>, vector<8x32xf32> -> vector<8x32xf32>
    %c0_24 = arith.constant 0 : index
    %c0_25 = arith.constant 0 : index
    %48 = vector.load %arg2[%c0_24, %c0_25] : memref<8x6xf32, #tpu.memory_space<vmem>>, vector<8x6xf32>
    %c0_26 = arith.constant 0 : index
    %c0_27 = arith.constant 0 : index
    %49 = vector.load %arg7[%c0_26, %c0_27] : memref<6x32xf32, #tpu.memory_space<vmem>>, vector<6x32xf32>
    %cst_28 = arith.constant dense<0.000000e+00> : vector<8x32xf32>
    %50 = tpu.matmul %48, %49, %cst_28 {dimension_numbers = #tpu.dot_dimension_numbers<[1], [0], [0], [1], [0, 0, 1, 1], [], []>} : vector<8x6xf32>, vector<6x32xf32>, vector<8x32xf32> -> vector<8x32xf32>
    %51 = arith.addf %47, %50 : vector<8x32xf32>
    %cst_29 = arith.constant 0.000000e+00 : f32
    %52 = vector.broadcast %cst_29 : f32 to vector<8x32xf32>
    %53 = arith.cmpf oge, %51, %52 : vector<8x32xf32>
    %c0_30 = arith.constant 0 : index
    %c0_31 = arith.constant 0 : index
    %54 = vector.load %arg8[%c0_30, %c0_31] : memref<1x32xf32, #tpu.memory_space<vmem>>, vector<1x32xf32>
    %55 = vector.broadcast %54 : vector<1x32xf32> to vector<8x32xf32>
    %56 = arith.mulf %55, %51 : vector<8x32xf32>
    %57 = arith.select %53, %51, %56 : vector<8x32xi1>, vector<8x32xf32>
    %c0_32 = arith.constant 0 : index
    %c0_33 = arith.constant 0 : index
    %58 = vector.load %arg9[%c0_32, %c0_33] : memref<32x16xf32, #tpu.memory_space<vmem>>, vector<32x16xf32>
    %cst_34 = arith.constant dense<0.000000e+00> : vector<8x16xf32>
    %59 = tpu.matmul %57, %58, %cst_34 {dimension_numbers = #tpu.dot_dimension_numbers<[1], [0], [0], [1], [0, 0, 1, 1], [], []>} : vector<8x32xf32>, vector<32x16xf32>, vector<8x16xf32> -> vector<8x16xf32>
    %c0_35 = arith.constant 0 : index
    %c0_36 = arith.constant 0 : index
    %60 = vector.load %arg10[%c0_35, %c0_36] : memref<1x16xf32, #tpu.memory_space<vmem>>, vector<1x16xf32>
    %61 = vector.broadcast %60 : vector<1x16xf32> to vector<8x16xf32>
    %62 = arith.addf %59, %61 : vector<8x16xf32>
    %cst_37 = arith.constant 0.000000e+00 : f32
    %63 = vector.broadcast %cst_37 : f32 to vector<8x16xf32>
    %64 = arith.cmpf oge, %62, %63 : vector<8x16xf32>
    %c0_38 = arith.constant 0 : index
    %c0_39 = arith.constant 0 : index
    %65 = vector.load %arg11[%c0_38, %c0_39] : memref<1x16xf32, #tpu.memory_space<vmem>>, vector<1x16xf32>
    %66 = vector.broadcast %65 : vector<1x16xf32> to vector<8x16xf32>
    %67 = arith.mulf %66, %62 : vector<8x16xf32>
    %68 = arith.select %64, %62, %67 : vector<8x16xi1>, vector<8x16xf32>
    %c0_40 = arith.constant 0 : index
    %c0_41 = arith.constant 0 : index
    %69 = vector.load %arg12[%c0_40, %c0_41] : memref<16x8xf32, #tpu.memory_space<vmem>>, vector<16x8xf32>
    %cst_42 = arith.constant dense<0.000000e+00> : vector<8x8xf32>
    %70 = tpu.matmul %68, %69, %cst_42 {dimension_numbers = #tpu.dot_dimension_numbers<[1], [0], [0], [1], [0, 0, 1, 1], [], []>} : vector<8x16xf32>, vector<16x8xf32>, vector<8x8xf32> -> vector<8x8xf32>
    %c0_43 = arith.constant 0 : index
    %c0_44 = arith.constant 0 : index
    %71 = vector.load %arg13[%c0_43, %c0_44] : memref<1x8xf32, #tpu.memory_space<vmem>>, vector<1x8xf32>
    %72 = vector.broadcast %71 : vector<1x8xf32> to vector<8x8xf32>
    %73 = arith.addf %70, %72 : vector<8x8xf32>
    %cst_45 = arith.constant 0.000000e+00 : f32
    %74 = vector.broadcast %cst_45 : f32 to vector<8x8xf32>
    %75 = arith.cmpf oge, %73, %74 : vector<8x8xf32>
    %c0_46 = arith.constant 0 : index
    %c0_47 = arith.constant 0 : index
    %76 = vector.load %arg14[%c0_46, %c0_47] : memref<1x8xf32, #tpu.memory_space<vmem>>, vector<1x8xf32>
    %77 = vector.broadcast %76 : vector<1x8xf32> to vector<8x8xf32>
    %78 = arith.mulf %77, %73 : vector<8x8xf32>
    %79 = arith.select %75, %73, %78 : vector<8x8xi1>, vector<8x8xf32>
    %c0_48 = arith.constant 0 : index
    %c0_49 = arith.constant 0 : index
    %80 = vector.load %arg15[%c0_48, %c0_49] : memref<8x128xf32, #tpu.memory_space<vmem>>, vector<8x128xf32>
    %cst_50 = arith.constant dense<0.000000e+00> : vector<8x128xf32>
    %81 = tpu.matmul %79, %80, %cst_50 {dimension_numbers = #tpu.dot_dimension_numbers<[1], [0], [0], [1], [0, 0, 1, 1], [], []>} : vector<8x8xf32>, vector<8x128xf32>, vector<8x128xf32> -> vector<8x128xf32>
    %c0_51 = arith.constant 0 : index
    %c0_52 = arith.constant 0 : index
    %82 = vector.load %arg16[%c0_51, %c0_52] : memref<1x128xf32, #tpu.memory_space<vmem>>, vector<1x128xf32>
    %83 = vector.broadcast %82 : vector<1x128xf32> to vector<8x128xf32>
    %84 = arith.addf %81, %83 : vector<8x128xf32>
    %c0_53 = arith.constant 0 : index
    %c0_54 = arith.constant 0 : index
    %85 = vector.load %arg17[%c0_53, %c0_54] : memref<8x128xf32, #tpu.memory_space<vmem>>, vector<8x128xf32>
    tpu.vector_store %arg17[%c0_53, %c0_54], %84 {strides = array<i32>} : memref<8x128xf32, #tpu.memory_space<vmem>>, vector<8x128xf32>,
    return
  }
  func.func @transform_0(%arg0: i32) -> (i32, i32, i32) {
    %c0_i32 = arith.constant 0 : i32
    %c0_i32_0 = arith.constant 0 : i32
    %c0_i32_1 = arith.constant 0 : i32
    return %c0_i32, %arg0, %c0_i32_0 : i32, i32, i32
  }
  func.func @transform_1(%arg0: i32) -> (i32, i32) {
    %c0_i32 = arith.constant 0 : i32
    %c0_i32_0 = arith.constant 0 : i32
    return %arg0, %c0_i32 : i32, i32
  }
  func.func @transform_2(%arg0: i32) -> (i32, i32) {
    %c0_i32 = arith.constant 0 : i32
    %c0_i32_0 = arith.constant 0 : i32
    %c0_i32_1 = arith.constant 0 : i32
    return %c0_i32, %c0_i32_0 : i32, i32
  }
  func.func @transform_3(%arg0: i32) -> (i32, i32) {
    %c0_i32 = arith.constant 0 : i32
    %c0_i32_0 = arith.constant 0 : i32
    %c0_i32_1 = arith.constant 0 : i32
    return %c0_i32, %c0_i32_0 : i32, i32
  }
  func.func @transform_4(%arg0: i32) -> (i32, i32) {
    %c0_i32 = arith.constant 0 : i32
    %c0_i32_0 = arith.constant 0 : i32
    %c0_i32_1 = arith.constant 0 : i32
    return %c0_i32, %c0_i32_0 : i32, i32
  }
  func.func @transform_5(%arg0: i32) -> (i32, i32) {
    %c0_i32 = arith.constant 0 : i32
    %c0_i32_0 = arith.constant 0 : i32
    %c0_i32_1 = arith.constant 0 : i32
    return %c0_i32, %c0_i32_0 : i32, i32
  }
  func.func @transform_6(%arg0: i32) -> (i32, i32) {
    %c0_i32 = arith.constant 0 : i32
    %c0_i32_0 = arith.constant 0 : i32
    %c0_i32_1 = arith.constant 0 : i32
    return %c0_i32, %c0_i32_0 : i32, i32
  }
  func.func @transform_7(%arg0: i32) -> (i32, i32) {
    %c0_i32 = arith.constant 0 : i32
    %c0_i32_0 = arith.constant 0 : i32
    %c0_i32_1 = arith.constant 0 : i32
    return %c0_i32, %c0_i32_0 : i32, i32
  }
  func.func @transform_8(%arg0: i32) -> (i32, i32) {
    %c0_i32 = arith.constant 0 : i32
    %c0_i32_0 = arith.constant 0 : i32
    %c0_i32_1 = arith.constant 0 : i32
    return %c0_i32, %c0_i32_0 : i32, i32
  }
  func.func @transform_9(%arg0: i32) -> (i32, i32) {
    %c0_i32 = arith.constant 0 : i32
    %c0_i32_0 = arith.constant 0 : i32
    %c0_i32_1 = arith.constant 0 : i32
    return %c0_i32, %c0_i32_0 : i32, i32
  }
  func.func @transform_10(%arg0: i32) -> (i32, i32) {
    %c0_i32 = arith.constant 0 : i32
    %c0_i32_0 = arith.constant 0 : i32
    %c0_i32_1 = arith.constant 0 : i32
    return %c0_i32, %c0_i32_0 : i32, i32
  }
  func.func @transform_11(%arg0: i32) -> (i32, i32) {
    %c0_i32 = arith.constant 0 : i32
    %c0_i32_0 = arith.constant 0 : i32
    %c0_i32_1 = arith.constant 0 : i32
    return %c0_i32, %c0_i32_0 : i32, i32
  }
  func.func @transform_12(%arg0: i32) -> (i32, i32) {
    %c0_i32 = arith.constant 0 : i32
    %c0_i32_0 = arith.constant 0 : i32
    %c0_i32_1 = arith.constant 0 : i32
    return %c0_i32, %c0_i32_0 : i32, i32
  }
  func.func @transform_13(%arg0: i32) -> (i32, i32) {
    %c0_i32 = arith.constant 0 : i32
    %c0_i32_0 = arith.constant 0 : i32
    %c0_i32_1 = arith.constant 0 : i32
    return %c0_i32, %c0_i32_0 : i32, i32
  }
  func.func @transform_14(%arg0: i32) -> (i32, i32) {
    %c0_i32 = arith.constant 0 : i32
    %c0_i32_0 = arith.constant 0 : i32
    %c0_i32_1 = arith.constant 0 : i32
    return %c0_i32, %c0_i32_0 : i32, i32
  }
  func.func @transform_15(%arg0: i32) -> (i32, i32) {
    %c0_i32 = arith.constant 0 : i32
    %c0_i32_0 = arith.constant 0 : i32
    %c0_i32_1 = arith.constant 0 : i32
    return %c0_i32, %c0_i32_0 : i32, i32
  }
  func.func @transform_16(%arg0: i32) -> (i32, i32) {
    %c0_i32 = arith.constant 0 : i32
    %c0_i32_0 = arith.constant 0 : i32
    return %arg0, %c0_i32 : i32, i32
  }
}

</mosaic_0001>

<llo_original>
// kernel: forward_pallas.1
$region0: #{forward_pallas.1}
  #allocation0 [shape = 'u32[]', space=smem, size = 0x4, offset = 0x4, fixed_abs, tag = 'smem constant byte address 0x4 - core index']
  #allocation1 [shape = 'u32[72,128]{1,0:T(1,128)}', space=vmem, size = 0x9000, scoped, tag = 'internal scratch']
  %s0 = inlined_call_operand.vmem [shape: f32[4,8,100], index: 0, kind: input, shape index: {}]
  %s1 = inlined_call_operand.vmem [shape: f32[8,6], index: 1, kind: input, shape index: {}]
  %s2 = inlined_call_operand.vmem [shape: f32[100,32], index: 2, kind: input, shape index: {}]
  %s3 = inlined_call_operand.vmem [shape: f32[1,32], index: 3, kind: input, shape index: {}]
  %s4 = inlined_call_operand.vmem [shape: f32[1,32], index: 4, kind: input, shape index: {}]
  %s5 = inlined_call_operand.vmem [shape: f32[32,32], index: 5, kind: input, shape index: {}]
  %s6 = inlined_call_operand.vmem [shape: f32[6,32], index: 6, kind: input, shape index: {}]
  %s7 = inlined_call_operand.vmem [shape: f32[1,32], index: 7, kind: input, shape index: {}]
  %s8 = inlined_call_operand.vmem [shape: f32[32,16], index: 8, kind: input, shape index: {}]
  %s9 = inlined_call_operand.vmem [shape: f32[1,16], index: 9, kind: input, shape index: {}]
  %s10 = inlined_call_operand.vmem [shape: f32[1,16], index: 10, kind: input, shape index: {}]
  %s11 = inlined_call_operand.vmem [shape: f32[16,8], index: 11, kind: input, shape index: {}]
  %s12 = inlined_call_operand.vmem [shape: f32[1,8], index: 12, kind: input, shape index: {}]
  %s13 = inlined_call_operand.vmem [shape: f32[1,8], index: 13, kind: input, shape index: {}]
  %s14 = inlined_call_operand.vmem [shape: f32[8,128], index: 14, kind: input, shape index: {}]
  %s15 = inlined_call_operand.vmem [shape: f32[1,128], index: 15, kind: input, shape index: {}]
  %s16 = inlined_call_operand.vmem [shape: f32[8,128], index: 16, kind: output, shape index: {}]
  %s17 = sld [smem:[#allocation0]]
  $region74: #{forward_pallas.1} parent=0
    _
  %s19 = ssub.s32 1, %s17
  %s20 = scalar_select 0, %s19, %s17
  // Predicated region
  $region2: #{forward_pallas.1} parent=0 // pred_check
    _
  $region3: #{forward_pallas.1} parent=0 // pred_check_branch
    %22 = sbr.rel (0) target = $region5
  $region4: #{forward_pallas.1} parent=0 // pred_region
    _
  $region5: #{forward_pallas.1} parent=0 // pred_fallthru
    _
  // Predicated region
  $region6: #{forward_pallas.1} parent=0 // pred_check
    _
  $region7: #{forward_pallas.1} parent=0 // pred_check_branch
    %24 = sbr.rel (0) target = $region9
  $region8: #{forward_pallas.1} parent=0 // pred_region
    _
  $region9: #{forward_pallas.1} parent=0 // pred_fallthru
    _
  // Predicated region
  $region10: #{forward_pallas.1} parent=0 // pred_check
    _
  $region11: #{forward_pallas.1} parent=0 // pred_check_branch
    %26 = sbr.rel (0) target = $region13
  $region12: #{forward_pallas.1} parent=0 // pred_region
    _
  $region13: #{forward_pallas.1} parent=0 // pred_fallthru
    _
  // Predicated region
  $region14: #{forward_pallas.1} parent=0 // pred_check
    _
  $region15: #{forward_pallas.1} parent=0 // pred_check_branch
    %28 = sbr.rel (0) target = $region17
  $region16: #{forward_pallas.1} parent=0 // pred_region
    _
  $region17: #{forward_pallas.1} parent=0 // pred_fallthru
    _
  // Predicated region
  $region18: #{forward_pallas.1} parent=0 // pred_check
    _
  $region19: #{forward_pallas.1} parent=0 // pred_check_branch
    %30 = sbr.rel (0) target = $region21
  $region20: #{forward_pallas.1} parent=0 // pred_region
    _
  $region21: #{forward_pallas.1} parent=0 // pred_fallthru
    _
  // Predicated region
  $region22: #{forward_pallas.1} parent=0 // pred_check
    _
  $region23: #{forward_pallas.1} parent=0 // pred_check_branch
    %32 = sbr.rel (0) target = $region25
  $region24: #{forward_pallas.1} parent=0 // pred_region
    _
  $region25: #{forward_pallas.1} parent=0 // pred_fallthru
    _
  // Predicated region
  $region26: #{forward_pallas.1} parent=0 // pred_check
    _
  $region27: #{forward_pallas.1} parent=0 // pred_check_branch
    %34 = sbr.rel (0) target = $region29
  $region28: #{forward_pallas.1} parent=0 // pred_region
    _
  $region29: #{forward_pallas.1} parent=0 // pred_fallthru
    _
  // Predicated region
  $region30: #{forward_pallas.1} parent=0 // pred_check
    _
  $region31: #{forward_pallas.1} parent=0 // pred_check_branch
    %36 = sbr.rel (0) target = $region33
  $region32: #{forward_pallas.1} parent=0 // pred_region
    _
  $region33: #{forward_pallas.1} parent=0 // pred_fallthru
    _
  // Predicated region
  $region34: #{forward_pallas.1} parent=0 // pred_check
    _
  $region35: #{forward_pallas.1} parent=0 // pred_check_branch
    %38 = sbr.rel (0) target = $region37
  $region36: #{forward_pallas.1} parent=0 // pred_region
    _
  $region37: #{forward_pallas.1} parent=0 // pred_fallthru
    _
  // Predicated region
  $region38: #{forward_pallas.1} parent=0 // pred_check
    _
  $region39: #{forward_pallas.1} parent=0 // pred_check_branch
    %40 = sbr.rel (0) target = $region41
  $region40: #{forward_pallas.1} parent=0 // pred_region
    _
  $region41: #{forward_pallas.1} parent=0 // pred_fallthru
    _
  // Predicated region
  $region42: #{forward_pallas.1} parent=0 // pred_check
    _
  $region43: #{forward_pallas.1} parent=0 // pred_check_branch
    %42 = sbr.rel (0) target = $region45
  $region44: #{forward_pallas.1} parent=0 // pred_region
    _
  $region45: #{forward_pallas.1} parent=0 // pred_fallthru
    _
  // Predicated region
  $region46: #{forward_pallas.1} parent=0 // pred_check
    _
  $region47: #{forward_pallas.1} parent=0 // pred_check_branch
    %44 = sbr.rel (0) target = $region49
  $region48: #{forward_pallas.1} parent=0 // pred_region
    _
  $region49: #{forward_pallas.1} parent=0 // pred_fallthru
    _
  // Predicated region
  $region50: #{forward_pallas.1} parent=0 // pred_check
    _
  $region51: #{forward_pallas.1} parent=0 // pred_check_branch
    %46 = sbr.rel (0) target = $region53
  $region52: #{forward_pallas.1} parent=0 // pred_region
    _
  $region53: #{forward_pallas.1} parent=0 // pred_fallthru
    _
  // Predicated region
  $region54: #{forward_pallas.1} parent=0 // pred_check
    _
  $region55: #{forward_pallas.1} parent=0 // pred_check_branch
    %48 = sbr.rel (0) target = $region57
  $region56: #{forward_pallas.1} parent=0 // pred_region
    _
  $region57: #{forward_pallas.1} parent=0 // pred_fallthru
    _
  // Predicated region
  $region58: #{forward_pallas.1} parent=0 // pred_check
    _
  $region59: #{forward_pallas.1} parent=0 // pred_check_branch
    %50 = sbr.rel (0) target = $region61
  $region60: #{forward_pallas.1} parent=0 // pred_region
    _
  $region61: #{forward_pallas.1} parent=0 // pred_fallthru
    _
  // Predicated region
  $region62: #{forward_pallas.1} parent=0 // pred_check
    _
  $region63: #{forward_pallas.1} parent=0 // pred_check_branch
    %52 = sbr.rel (0) target = $region65
  $region64: #{forward_pallas.1} parent=0 // pred_region
    _
  $region65: #{forward_pallas.1} parent=0 // pred_fallthru
    _
  %v53 = vld [vmem:[%s2] sm:$0xff]
  %v54 = vld [vmem:[%s2 + $0x8] sm:$0xff]
  %v55 = vld [vmem:[%s2 + $0x10] sm:$0xff]
  %v56 = vld [vmem:[%s2 + $0x18] sm:$0xff]
  %v57 = vld [vmem:[%s2 + $0x20] sm:$0xff]
  %v58 = vld [vmem:[%s2 + $0x28] sm:$0xff]
  %v59 = vld [vmem:[%s2 + $0x30] sm:$0xff]
  %v60 = vld [vmem:[%s2 + $0x38] sm:$0xff]
  %v61 = vld [vmem:[%s2 + $0x40] sm:$0xff]
  %v62 = vld [vmem:[%s2 + $0x48] sm:$0xff]
  %v63 = vld [vmem:[%s2 + $0x50] sm:$0xff]
  %v64 = vld [vmem:[%s2 + $0x58] sm:$0xff]
  %v65 = vld [vmem:[%s2 + $0x60] sm:$0xf]
  %v66 = vld [vmem:[%s3] sm:$0x1]
  %v67 = vld [vmem:[%s4] sm:$0x1]
  %v68 = vld [vmem:[%s0] sm:$0xff]
  %v70 = vperm.slane %v66, 0
  %vm72 = vcmask 818176
  %v74 = vsel %vm72, %v68, 0
  %vm76 = vcmask 1043456
  %v78 = vsel %vm76, %v65, 0
  %80 = vmatpush.msra.mxu0 0.0
  %81 = vmatpush.msra.mxu0 0.0
  %82 = vmatpush.msra.mxu0 0.0
  %83 = vmatpush.msra.mxu0 %v78
  %84 = vmatpush.msra.mxu0 %v64
  %85 = vmatpush.msra.mxu0 %v63
  %86 = vmatpush.msra.mxu0 %v62
  %87 = vmatpush.msra.mxu0 %v61
  %88 = vmatpush.msra.mxu0 %v60
  %89 = vmatpush.msra.mxu0 %v59
  %90 = vmatpush.msra.mxu0 %v58
  %91 = vmatpush.msra.mxu0 %v57
  %92 = vmatpush.msra.mxu0 %v56
  %93 = vmatpush.msra.mxu0 %v55
  %94 = vmatpush.msra.mxu0 %v54
  %95 = vmatpush.msra.mxu0 %v53
  %96 = vmatmul.f32.gmra.mxu0 %v74
  %v97 = vpop.f32.mrf.mxu0
  %v98 = vadd.f32 %v70, %v97
  %99 = vdwg.mxu0
  %vm100 = vcmp.ge.f32.partialorder %v98, 0.0
  %v102 = vperm.slane %v67, 0
  %v104 = vmul.f32 %v102, %v98
  %v105 = vsel %vm100, %v98, %v104
  %s106 = scalar_lea.vmem %s0, 8
  %v107 = vld [vmem:[%s106] sm:$0xff]
  %v109 = vsel %vm72, %v107, 0
  %111 = vmatpush.msra.mxu0 0.0
  %112 = vmatpush.msra.mxu0 0.0
  %113 = vmatpush.msra.mxu0 0.0
  %114 = vmatpush.msra.mxu0 %v78
  %115 = vmatpush.msra.mxu0 %v64
  %116 = vmatpush.msra.mxu0 %v63
  %117 = vmatpush.msra.mxu0 %v62
  %118 = vmatpush.msra.mxu0 %v61
  %119 = vmatpush.msra.mxu0 %v60
  %120 = vmatpush.msra.mxu0 %v59
  %121 = vmatpush.msra.mxu0 %v58
  %122 = vmatpush.msra.mxu0 %v57
  %123 = vmatpush.msra.mxu0 %v56
  %124 = vmatpush.msra.mxu0 %v55
  %125 = vmatpush.msra.mxu0 %v54
  %126 = vmatpush.msra.mxu0 %v53
  %127 = vmatmul.f32.gmra.mxu0 %v109
  %v128 = vpop.f32.mrf.mxu0
  %v129 = vadd.f32 %v70, %v128
  %130 = vdwg.mxu0
  %vm131 = vcmp.ge.f32.partialorder %v129, 0.0
  %v132 = vmul.f32 %v102, %v129
  %v133 = vsel %vm131, %v129, %v132
  %v134 = vmax.f32 %v105, %v133
  %s135 = scalar_lea.vmem %s0, 16
  %v136 = vld [vmem:[%s135] sm:$0xff]
  %v138 = vsel %vm72, %v136, 0
  %140 = vmatpush.msra.mxu0 0.0
  %141 = vmatpush.msra.mxu0 0.0
  %142 = vmatpush.msra.mxu0 0.0
  %143 = vmatpush.msra.mxu0 %v78
  %144 = vmatpush.msra.mxu0 %v64
  %145 = vmatpush.msra.mxu0 %v63
  %146 = vmatpush.msra.mxu0 %v62
  %147 = vmatpush.msra.mxu0 %v61
  %148 = vmatpush.msra.mxu0 %v60
  %149 = vmatpush.msra.mxu0 %v59
  %150 = vmatpush.msra.mxu0 %v58
  %151 = vmatpush.msra.mxu0 %v57
  %152 = vmatpush.msra.mxu0 %v56
  %153 = vmatpush.msra.mxu0 %v55
  %154 = vmatpush.msra.mxu0 %v54
  %155 = vmatpush.msra.mxu0 %v53
  %156 = vmatmul.f32.gmra.mxu0 %v138
  %v157 = vpop.f32.mrf.mxu0
  %v158 = vadd.f32 %v70, %v157
  %159 = vdwg.mxu0
  %vm160 = vcmp.ge.f32.partialorder %v158, 0.0
  %v161 = vmul.f32 %v102, %v158
  %v162 = vsel %vm160, %v158, %v161
  %v163 = vmax.f32 %v134, %v162
  %s164 = scalar_lea.vmem %s0, 24
  %v165 = vld [vmem:[%s164] sm:$0xff]
  %v167 = vsel %vm72, %v165, 0
  %169 = vmatpush.msra.mxu0 0.0
  %170 = vmatpush.msra.mxu0 0.0
  %171 = vmatpush.msra.mxu0 0.0
  %172 = vmatpush.msra.mxu0 %v78
  %173 = vmatpush.msra.mxu0 %v64
  %174 = vmatpush.msra.mxu0 %v63
  %175 = vmatpush.msra.mxu0 %v62
  %176 = vmatpush.msra.mxu0 %v61
  %177 = vmatpush.msra.mxu0 %v60
  %178 = vmatpush.msra.mxu0 %v59
  %179 = vmatpush.msra.mxu0 %v58
  %180 = vmatpush.msra.mxu0 %v57
  %181 = vmatpush.msra.mxu0 %v56
  %182 = vmatpush.msra.mxu0 %v55
  %183 = vmatpush.msra.mxu0 %v54
  %184 = vmatpush.msra.mxu0 %v53
  %185 = vmatmul.f32.gmra.mxu0 %v167
  %v186 = vpop.f32.mrf.mxu0
  %v187 = vadd.f32 %v70, %v186
  %188 = vdwg.mxu0
  %vm189 = vcmp.ge.f32.partialorder %v187, 0.0
  %v190 = vmul.f32 %v102, %v187
  %v191 = vsel %vm189, %v187, %v190
  %v192 = vmax.f32 %v163, %v191
  %v193 = vld [vmem:[%s5] sm:$0xff]
  %v194 = vld [vmem:[%s5 + $0x8] sm:$0xff]
  %v195 = vld [vmem:[%s5 + $0x10] sm:$0xff]
  %v196 = vld [vmem:[%s5 + $0x18] sm:$0xff]
  %v197 = vld [vmem:[%s1] sm:$0xff]
  %v198 = vld [vmem:[%s6] sm:$0x3f]
  %vm199 = vcmask 48128
  %v201 = vsel %vm199, %v197, 0
  %vm203 = vcmask 1045504
  %v205 = vsel %vm203, %v198, 0
  %207 = vmatpush.msra.mxu0 0.0
  %208 = vmatpush.msra.mxu0 0.0
  %209 = vmatpush.msra.mxu0 0.0
  %210 = vmatpush.msra.mxu0 0.0
  %211 = vmatpush.msra.mxu0 0.0
  %212 = vmatpush.msra.mxu0 0.0
  %213 = vmatpush.msra.mxu0 0.0
  %214 = vmatpush.msra.mxu0 0.0
  %215 = vmatpush.msra.mxu0 0.0
  %216 = vmatpush.msra.mxu0 0.0
  %217 = vmatpush.msra.mxu0 0.0
  %218 = vmatpush.msra.mxu0 0.0
  %219 = vmatpush.msra.mxu0 0.0
  %220 = vmatpush.msra.mxu0 0.0
  %221 = vmatpush.msra.mxu0 0.0
  %222 = vmatpush.msra.mxu0 %v205
  %223 = vmatmul.f32.gmra.mxu0 %v201
  %v224 = vpop.f32.mrf.mxu0
  %v225 = vadd.f32 0.0, %v224
  %226 = vdwg.mxu0
  %vm227 = vcmask 261120
  %v229 = vsel %vm227, %v192, 0
  %231 = vmatpush.msra.mxu0 0.0
  %232 = vmatpush.msra.mxu0 0.0
  %233 = vmatpush.msra.mxu0 0.0
  %234 = vmatpush.msra.mxu0 0.0
  %235 = vmatpush.msra.mxu0 0.0
  %236 = vmatpush.msra.mxu0 0.0
  %237 = vmatpush.msra.mxu0 0.0
  %238 = vmatpush.msra.mxu0 0.0
  %239 = vmatpush.msra.mxu0 0.0
  %240 = vmatpush.msra.mxu0 0.0
  %241 = vmatpush.msra.mxu0 0.0
  %242 = vmatpush.msra.mxu0 0.0
  %243 = vmatpush.msra.mxu0 %v196
  %244 = vmatpush.msra.mxu0 %v195
  %245 = vmatpush.msra.mxu0 %v194
  %246 = vmatpush.msra.mxu0 %v193
  %247 = vmatmul.f32.gmra.mxu0 %v229
  %v248 = vpop.f32.mrf.mxu0
  %v249 = vadd.f32 %v225, %v248
  %250 = vdwg.mxu0
  %vm251 = vcmp.ge.f32.partialorder %v249, 0.0
  %v252 = vld [vmem:[%s7] sm:$0x1]
  %v254 = vperm.slane %v252, 0
  %v256 = vmul.f32 %v254, %v249
  %v257 = vsel %vm251, %v249, %v256
  %v258 = vld [vmem:[%s8] sm:$0xff]
  %v259 = vld [vmem:[%s8 + $0x8] sm:$0xff]
  %v260 = vld [vmem:[%s8 + $0x10] sm:$0xff]
  %v261 = vld [vmem:[%s8 + $0x18] sm:$0xff]
  %v262 = vld [vmem:[%s9] sm:$0x1]
  %v264 = vperm.slane %v262, 0
  %v267 = vsel %vm227, %v257, 0
  %269 = vmatpush.msra.mxu0 0.0
  %270 = vmatpush.msra.mxu0 0.0
  %271 = vmatpush.msra.mxu0 0.0
  %272 = vmatpush.msra.mxu0 0.0
  %273 = vmatpush.msra.mxu0 0.0
  %274 = vmatpush.msra.mxu0 0.0
  %275 = vmatpush.msra.mxu0 0.0
  %276 = vmatpush.msra.mxu0 0.0
  %277 = vmatpush.msra.mxu0 0.0
  %278 = vmatpush.msra.mxu0 0.0
  %279 = vmatpush.msra.mxu0 0.0
  %280 = vmatpush.msra.mxu0 0.0
  %281 = vmatpush.msra.mxu0 %v261
  %282 = vmatpush.msra.mxu0 %v260
  %283 = vmatpush.msra.mxu0 %v259
  %284 = vmatpush.msra.mxu0 %v258
  %285 = vmatmul.f32.gmra.mxu0 %v267
  %v286 = vpop.f32.mrf.mxu0
  %v287 = vadd.f32 %v264, %v286
  %288 = vdwg.mxu0
  %vm289 = vcmp.ge.f32.partialorder %v287, 0.0
  %v290 = vld [vmem:[%s10] sm:$0x1]
  %v292 = vperm.slane %v290, 0
  %v294 = vmul.f32 %v292, %v287
  %v295 = vsel %vm289, %v287, %v294
  %v296 = vld [vmem:[%s11] sm:$0xff]
  %v297 = vld [vmem:[%s11 + $0x8] sm:$0xff]
  %v298 = vld [vmem:[%s12] sm:$0x1]
  %v300 = vperm.slane %v298, 0
  %vm302 = vcmask 130048
  %v304 = vsel %vm302, %v295, 0
  %306 = vmatpush.msra.mxu0 0.0
  %307 = vmatpush.msra.mxu0 0.0
  %308 = vmatpush.msra.mxu0 0.0
  %309 = vmatpush.msra.mxu0 0.0
  %310 = vmatpush.msra.mxu0 0.0
  %311 = vmatpush.msra.mxu0 0.0
  %312 = vmatpush.msra.mxu0 0.0
  %313 = vmatpush.msra.mxu0 0.0
  %314 = vmatpush.msra.mxu0 0.0
  %315 = vmatpush.msra.mxu0 0.0
  %316 = vmatpush.msra.mxu0 0.0
  %317 = vmatpush.msra.mxu0 0.0
  %318 = vmatpush.msra.mxu0 0.0
  %319 = vmatpush.msra.mxu0 0.0
  %320 = vmatpush.msra.mxu0 %v297
  %321 = vmatpush.msra.mxu0 %v296
  %322 = vmatmul.f32.gmra.mxu0 %v304
  %v323 = vpop.f32.mrf.mxu0
  %v324 = vadd.f32 %v300, %v323
  %325 = vdwg.mxu0
  %vm326 = vcmp.ge.f32.partialorder %v324, 0.0
  %v327 = vld [vmem:[%s13] sm:$0x1]
  %v329 = vperm.slane %v327, 0
  %v331 = vmul.f32 %v329, %v324
  %v332 = vsel %vm326, %v324, %v331
  %v333 = vld [vmem:[%s14] sm:$0xff]
  %v334 = vld [vmem:[%s15] sm:$0x1]
  %v336 = vperm.slane %v334, 0
  %vm338 = vcmask 64512
  %v340 = vsel %vm338, %v332, 0
  %342 = vmatpush.msra.mxu0 0.0
  %343 = vmatpush.msra.mxu0 0.0
  %344 = vmatpush.msra.mxu0 0.0
  %345 = vmatpush.msra.mxu0 0.0
  %346 = vmatpush.msra.mxu0 0.0
  %347 = vmatpush.msra.mxu0 0.0
  %348 = vmatpush.msra.mxu0 0.0
  %349 = vmatpush.msra.mxu0 0.0
  %350 = vmatpush.msra.mxu0 0.0
  %351 = vmatpush.msra.mxu0 0.0
  %352 = vmatpush.msra.mxu0 0.0
  %353 = vmatpush.msra.mxu0 0.0
  %354 = vmatpush.msra.mxu0 0.0
  %355 = vmatpush.msra.mxu0 0.0
  %356 = vmatpush.msra.mxu0 0.0
  %357 = vmatpush.msra.mxu0 %v333
  %358 = vmatmul.f32.gmra.mxu0 %v340
  %v359 = vpop.f32.mrf.mxu0
  %v360 = vadd.f32 %v336, %v359
  %361 = vdwg.mxu0
  %362 = vst [vmem:[%s16] sm:$0xff] %v360
  // Predicated region
  $region66: #{forward_pallas.1} parent=0 // pred_check
    _
  $region67: #{forward_pallas.1} parent=0 // pred_check_branch
    %364 = sbr.rel (0) target = $region69
  $region68: #{forward_pallas.1} parent=0 // pred_region
    _
  $region69: #{forward_pallas.1} parent=0 // pred_fallthru
    _
  // Predicated region
  $region70: #{forward_pallas.1} parent=0 // pred_check
    _
  $region71: #{forward_pallas.1} parent=0 // pred_check_branch
    %366 = sbr.rel (0) target = $region73
  $region72: #{forward_pallas.1} parent=0 // pred_region
    _
  $region73: #{forward_pallas.1} parent=0 // pred_fallthru
    _

</llo_original>
